<compile_context>
chip_gen: v6e
topology: v6e:2x2x1
jax: 0.10.0
libtpu: 0.0.40
codegen_flags: <defaults>
</compile_context>

<pallas_src>
import functools

import jax
import jax.numpy as jnp
import numpy as np
from jax.experimental import pallas as pl
from jax.experimental.pallas import tpu as pltpu

ALPHA = 1.0
GAMMA = 2.0
IGNORE_INDEX = -100


# ----------------------------------------------------------------------------- utils


def _tpu_vmem_and_cores():
    """(per-core VMEM capacity bytes, #TensorCores) with conservative fallbacks."""
    vmem_cap = None
    num_cores = 1
    try:
        info = pltpu.get_tpu_info()
        cap = getattr(info, "vmem_capacity_bytes", None)
        if cap:
            vmem_cap = int(cap)
        for attr in ("num_tensorcores", "tensorcores_per_chip", "num_cores",
                     "cores_per_chip", "core_count"):
            v = getattr(info, attr, None)
            if isinstance(v, int) and v > 0:
                num_cores = v
                break
    except Exception:  # no TPU info available -> conservative defaults
        pass
    if vmem_cap is None:
        vmem_cap = 64 * 1024 * 1024  # assume v7x-style 64 MiB/TC (safe everywhere)
    return vmem_cap, num_cores


def _vmem_plan(vmem_cap):
    """(vmem_limit_bytes, block+temporary budget) with headroom for compiler scratch."""
    limit = max(32 * 1024 * 1024,
                min(vmem_cap - 16 * 1024 * 1024, 100 * 1024 * 1024))
    budget = (limit * 3) // 4
    return int(limit), int(budget)


def _auto_tile_n(n_rows, n_cols, *, vmem_budget_bytes, in_itemsize):
    """Largest aligned row tile whose full VMEM footprint fits the budget.

    Accounts for the double-buffered logits block at the INPUT dtype, ~4 full-width
    f32/i32 in-kernel temporaries (x_f32/z, ez, cls_idx, onehot) that Mosaic
    materializes at tile size, and the double-buffered lane-padded int32 targets.
    """
    c_lanes = pl.cdiv(n_cols, 128) * 128
    per_row_bytes = 2 * c_lanes * in_itemsize + 4 * c_lanes * 4 + 2 * 512
    tile = int(vmem_budget_bytes // per_row_bytes)
    tile = max(8, min(tile, n_rows))
    align = 16 if in_itemsize == 2 else 8
    aligned = (tile // align) * align
    return max(8, aligned)


def _focal_pow(one_minus_pt, gamma):
    """(1 - pt) ** gamma, specialized for small integer gamma (no EUP log/exp pair)."""
    g = float(gamma)
    if g == 0.0:
        return jnp.ones_like(one_minus_pt)
    if g == int(g) and 1 <= int(g) <= 4:
        out = one_minus_pt
        for _ in range(int(g) - 1):
            out = out * one_minus_pt
        return out
    safe = jnp.maximum(one_minus_pt, 1e-30)
    return jnp.where(one_minus_pt <= 0.0, 0.0, jnp.exp(g * jnp.log(safe)))


# ---------------------------------------------------------------------------- kernel


def _focal_loss_kernel(x_ref, t_ref, o_ref, *, alpha, gamma, ignore_index,
                       n_valid, tile_n, tiles_per_split):
    c = pl.program_id(0)          # megacore split (parallel axis)
    i = pl.program_id(1)          # row-tile index within the split (arbitrary axis)

    # Per-split scalar accumulator in SMEM; the (1, 1) block is resident across the
    # whole `i` axis, so this is a running partial sum with no lane-sparse VMEM RMW.
    @pl.when(i == 0)
    def _():
        o_ref[0, 0] = jnp.float32(0.0)

    x = x_ref[...].astype(jnp.float32)                 # (tile_n, C) logits tile
    t = t_ref[...]                                     # (tile_n, 1) int32 labels

    # Row-validity mask. The data block index is clamped in the wrapper's index_map,
    # but row_ids are computed from the UNCLAMPED block index, so any duplicated
    # trailing tile (odd n_blocks on the 2-way split) and the partial last tile
    # contribute exactly 0 — no double counting, no garbage.
    block_idx = c * tiles_per_split + i
    row_ids = block_idx * tile_n + jax.lax.broadcasted_iota(
        jnp.int32, (tile_n, 1), 0)
    valid = (row_ids < n_valid) & (t != ignore_index)  # (tile_n, 1) bool

    # Numerically stable log-softmax pieces.
    m = jnp.max(x, axis=-1, keepdims=True)             # (tile_n, 1)
    z = x - m                                          # (tile_n, C)
    ez = jnp.exp(z)                                    # (tile_n, C)
    sum_ez = jnp.sum(ez, axis=-1, keepdims=True)       # (tile_n, 1)
    lse = jnp.log(sum_ez)                              # (tile_n, 1)

    # Gather the target column via a one-hot lane mask (no dynamic gather on TPU).
    # NOTE: labels outside [0, C) that are not ignore_index give z_tgt = 0 (loss=lse)
    # instead of erroring like PyTorch; inputs are assumed sanitized.
    cls_idx = jax.lax.broadcasted_iota(jnp.int32, z.shape, 1)
    onehot = cls_idx == t                              # (tile_n, C)
    z_tgt = jnp.sum(jnp.where(onehot, z, 0.0), axis=-1, keepdims=True)

    ce = lse - z_tgt                                   # cross-entropy per row (>= 0)
    pt = jnp.exp(-ce)                                  # tiny EUP exp; no 2nd masked reduce
    f = alpha * _focal_pow(1.0 - pt, gamma) * ce       # focal loss per row
    f = jnp.where(valid, f, 0.0)                       # zero ignored / out-of-range rows

    # Per-step reduction to a scalar, accumulated in SMEM.
    o_ref[0, 0] = o_ref[0, 0] + jnp.sum(f)


# --------------------------------------------------------------------------- wrapper


def focal_loss(inputs, targets, *, alpha=ALPHA, gamma=GAMMA,
               ignore_index=IGNORE_INDEX, tile_n=None, num_splits=None):
    """inputs: (N, C) float logits (f32 or bf16); targets: (N,) int labels. Scalar f32."""
    N, C = inputs.shape
    targets2d = targets.astype(jnp.int32).reshape(N, 1)

    vmem_cap, n_cores = _tpu_vmem_and_cores()
    vmem_limit, vmem_budget = _vmem_plan(vmem_cap)
    if num_splits is None:
        num_splits = 2 if n_cores >= 2 else 1          # megacore split only on v7x-class

    # Tiny-N corner case: an 8-sublane-aligned tile needs at least 8 rows backing it.
    n_rows = N
    if n_rows < 8:
        pad = 8 - n_rows
        inputs = jnp.pad(inputs, ((0, pad), (0, 0)))
        targets2d = jnp.pad(targets2d, ((0, pad), (0, 0)),
                            constant_values=ignore_index)
        n_rows = 8

    in_itemsize = jnp.dtype(inputs.dtype).itemsize
    if tile_n is None:
        tile_n = _auto_tile_n(n_rows, C, vmem_budget_bytes=vmem_budget,
                              in_itemsize=in_itemsize)
    tile_n = max(8, (min(int(tile_n), n_rows) // 8) * 8)

    n_blocks = pl.cdiv(n_rows, tile_n)
    tiles_per_split = pl.cdiv(n_blocks, num_splits)

    kernel = functools.partial(
        _focal_loss_kernel, alpha=float(alpha), gamma=float(gamma),
        ignore_index=int(ignore_index), n_valid=N, tile_n=tile_n,
        tiles_per_split=tiles_per_split)

    def data_map(c, i):
        # Clamp so a duplicated trailing tile on the second split stays in bounds;
        # its rows are masked out inside the kernel via the unclamped row_ids check.
        return (jnp.minimum(c * tiles_per_split + i, n_blocks - 1), 0)

    # TODO(synk): for vocab-scale C (where even tile_n=8 x C blows the VMEM budget),
    # add a class-dim grid axis with an online (flash-softmax style) running max/sum;
    # on v7x the row reductions could also be pushed onto the idle MXU via
    # jnp.dot(ez, ones((C, 1))) to relieve the VALU slot.
    partial = pl.pallas_call(
        kernel,
        out_shape=jax.ShapeDtypeStruct((num_splits, 1), jnp.float32),
        grid_spec=pltpu.PrefetchScalarGridSpec(
            num_scalar_prefetch=0,
            grid=(num_splits, tiles_per_split),
            in_specs=[
                pl.BlockSpec((tile_n, C), data_map),
                pl.BlockSpec((tile_n, 1), data_map),
            ],
            out_specs=pl.BlockSpec((1, 1), lambda c, i: (c, 0),
                                   memory_space=pltpu.MemorySpace.SMEM),
        ),
        compiler_params=pltpu.CompilerParams(
            dimension_semantics=("parallel", "arbitrary"),
            vmem_limit_bytes=vmem_limit),
    )(inputs, targets2d)

    # PyTorch's F_loss.mean() divides by the total row count, including ignored rows.
    return jnp.sum(partial) / jnp.float32(N)


# -------------------------------------------------------------------------- reference


def _reference_focal_loss(inputs, targets, alpha=ALPHA, gamma=GAMMA,
                          ignore_index=IGNORE_INDEX):
    x = np.asarray(inputs, dtype=np.float32)
    t = np.asarray(targets)
    m = x.max(axis=-1, keepdims=True)
    z = x - m
    lse = np.log(np.exp(z).sum(axis=-1, keepdims=True))[:, 0]
    valid = t != ignore_index
    safe_t = np.where(valid, t, 0)
    z_tgt = z[np.arange(x.shape[0]), safe_t]
    ce = np.where(valid, lse - z_tgt, 0.0)
    pt = np.exp(-ce)
    f = alpha * (1.0 - pt) ** gamma * ce
    return f.mean()


if __name__ == "__main__":
    key = jax.random.PRNGKey(0)
    k1, k2 = jax.random.split(key)

    N, C = 16, 32  # small shapes: 16 samples, 32 classes
    inputs = jax.random.normal(k1, (N, C), dtype=jnp.float32)
    targets = jax.random.randint(k2, (N,), 0, C, dtype=jnp.int32)
    # Make a couple of entries use ignore_index deterministically.
    targets = targets.at[0].set(IGNORE_INDEX).at[7].set(IGNORE_INDEX)

    loss = focal_loss(inputs, targets)
    loss = jax.block_until_ready(loss)

    ref = _reference_focal_loss(np.array(inputs), np.array(targets))
    assert np.allclose(np.array(loss), ref, rtol=1e-4, atol=1e-6), (loss, ref)
    print("KERNEL_OK")
</pallas_src>

<mosaic_0001>
module attributes {stable_mosaic.version = 11 : i64} {
  func.func @_focal_loss_kernel(%arg0: i32, %arg1: i32, %arg2: memref<16x32xf32, #tpu.memory_space<vmem>>, %arg3: memref<16x1xi32, #tpu.memory_space<vmem>>, %arg4: memref<1x1xf32, #tpu.memory_space<smem>>) attributes {dimension_semantics = [#tpu.dimension_semantics<parallel>, #tpu.dimension_semantics<arbitrary>], iteration_bounds = array<i64: 1, 1>, scalar_prefetch = 0 : i64, scratch_operands = 0 : i64, tpu.core_type = #tpu.core_type<tc>, window_params = [{transform_indices = @transform_0, window_bounds = array<i64: 16, 32>}, {transform_indices = @transform_1, window_bounds = array<i64: 16, 1>}, {transform_indices = @transform_2, window_bounds = array<i64: 1, 1>}]} {
    %c0_i32 = arith.constant 0 : i32
    %0 = arith.cmpi eq, %arg1, %c0_i32 : i32
    %1 = arith.extui %0 : i1 to i32
    %c0_i32_0 = arith.constant 0 : i32
    %2 = arith.cmpi ne, %1, %c0_i32_0 : i32
    scf.if %2 {
      %cst_17 = arith.constant 0.000000e+00 : f32
      %c0_18 = arith.constant 0 : index
      %c0_19 = arith.constant 0 : index
      %50 = memref.load %arg4[%c0_18, %c0_19] : memref<1x1xf32, #tpu.memory_space<smem>>
      memref.store %cst_17, %arg4[%c0_18, %c0_19] : memref<1x1xf32, #tpu.memory_space<smem>>
    } else {
    }
    %c0 = arith.constant 0 : index
    %c0_1 = arith.constant 0 : index
    %3 = vector.load %arg2[%c0, %c0_1] : memref<16x32xf32, #tpu.memory_space<vmem>>, vector<16x32xf32>
    %c0_2 = arith.constant 0 : index
    %c0_3 = arith.constant 0 : index
    %4 = vector.load %arg3[%c0_2, %c0_3] : memref<16x1xi32, #tpu.memory_space<vmem>>, vector<16x1xi32>
    %c1_i32 = arith.constant 1 : i32
    %5 = arith.muli %arg0, %c1_i32 : i32
    %6 = arith.addi %5, %arg1 : i32
    %c16_i32 = arith.constant 16 : i32
    %7 = arith.muli %6, %c16_i32 : i32
    %8 = tpu.iota {dimensions = array<i32: 0>} : vector<16x1xi32>
    %9 = vector.broadcast %7 : i32 to vector<16x1xi32>
    %10 = arith.addi %9, %8 : vector<16x1xi32>
    %c16_i32_4 = arith.constant 16 : i32
    %11 = vector.broadcast %c16_i32_4 : i32 to vector<16x1xi32>
    %12 = arith.cmpi slt, %10, %11 : vector<16x1xi32>
    %c-100_i32 = arith.constant -100 : i32
    %13 = vector.broadcast %c-100_i32 : i32 to vector<16x1xi32>
    %14 = arith.cmpi ne, %4, %13 : vector<16x1xi32>
    %15 = arith.andi %12, %14 : vector<16x1xi1>
    %cst = arith.constant dense<0xFF800000> : vector<16xf32>
    %16 = vector.multi_reduction <maximumf>, %3, %cst [1] : vector<16x32xf32> to vector<16xf32>
    %17 = vector.shape_cast %16 : vector<16xf32> to vector<16x1xf32>
    %18 = vector.broadcast %17 : vector<16x1xf32> to vector<16x32xf32>
    %19 = arith.subf %3, %18 : vector<16x32xf32>
    %20 = math.exp %19 : vector<16x32xf32>
    %cst_5 = arith.constant dense<0.000000e+00> : vector<16xf32>
    %21 = vector.multi_reduction <add>, %20, %cst_5 [1] : vector<16x32xf32> to vector<16xf32>
    %22 = vector.shape_cast %21 : vector<16xf32> to vector<16x1xf32>
    %23 = math.log %22 : vector<16x1xf32>
    %24 = tpu.iota {dimensions = array<i32: 1>} : vector<16x32xi32>
    %25 = vector.broadcast %4 : vector<16x1xi32> to vector<16x32xi32>
    %26 = arith.cmpi eq, %24, %25 : vector<16x32xi32>
    %cst_6 = arith.constant 0.000000e+00 : f32
    %27 = vector.broadcast %cst_6 : f32 to vector<16x32xf32>
    %28 = arith.select %26, %19, %27 : vector<16x32xi1>, vector<16x32xf32>
    %cst_7 = arith.constant dense<0.000000e+00> : vector<16xf32>
    %29 = vector.multi_reduction <add>, %28, %cst_7 [1] : vector<16x32xf32> to vector<16xf32>
    %30 = vector.shape_cast %29 : vector<16xf32> to vector<16x1xf32>
    %31 = arith.subf %23, %30 : vector<16x1xf32>
    %cst_8 = arith.constant 0.000000e+00 : f32
    %32 = vector.broadcast %cst_8 : f32 to vector<16x1xf32>
    %33 = arith.subf %32, %31 : vector<16x1xf32>
    %34 = math.exp %33 : vector<16x1xf32>
    %cst_9 = arith.constant 1.000000e+00 : f32
    %35 = vector.broadcast %cst_9 : f32 to vector<16x1xf32>
    %36 = arith.subf %35, %34 : vector<16x1xf32>
    %37 = arith.mulf %36, %36 : vector<16x1xf32>
    %cst_10 = arith.constant 1.000000e+00 : f32
    %38 = vector.broadcast %cst_10 : f32 to vector<16x1xf32>
    %39 = arith.mulf %38, %37 : vector<16x1xf32>
    %40 = arith.mulf %39, %31 : vector<16x1xf32>
    %cst_11 = arith.constant 0.000000e+00 : f32
    %41 = vector.broadcast %cst_11 : f32 to vector<16x1xf32>
    %42 = arith.select %15, %40, %41 : vector<16x1xi1>, vector<16x1xf32>
    %c0_12 = arith.constant 0 : index
    %c0_13 = arith.constant 0 : index
    %43 = memref.load %arg4[%c0_12, %c0_13] : memref<1x1xf32, #tpu.memory_space<smem>>
    %44 = vector.shape_cast %42 : vector<16x1xf32> to vector<1x16x1xf32>
    %cst_14 = arith.constant dense<0.000000e+00> : vector<1xf32>
    %45 = vector.multi_reduction <add>, %44, %cst_14 [1, 2] : vector<1x16x1xf32> to vector<1xf32>
    %46 = vector.shape_cast %45 : vector<1xf32> to vector<1x1x1xf32>
    %47 = vector.extract %46[0, 0, 0] : f32 from vector<1x1x1xf32>
    %48 = arith.addf %43, %47 : f32
    %c0_15 = arith.constant 0 : index
    %c0_16 = arith.constant 0 : index
    %49 = memref.load %arg4[%c0_15, %c0_16] : memref<1x1xf32, #tpu.memory_space<smem>>
    memref.store %48, %arg4[%c0_15, %c0_16] : memref<1x1xf32, #tpu.memory_space<smem>>
    return
  }
  func.func @transform_0(%arg0: i32, %arg1: i32) -> (i32, i32) {
    %c1_i32 = arith.constant 1 : i32
    %0 = arith.muli %arg0, %c1_i32 : i32
    %1 = arith.addi %0, %arg1 : i32
    %c0_i32 = arith.constant 0 : i32
    %2 = arith.minsi %1, %c0_i32 : i32
    %c0_i32_0 = arith.constant 0 : i32
    %c0_i32_1 = arith.constant 0 : i32
    return %2, %c0_i32_0 : i32, i32
  }
  func.func @transform_1(%arg0: i32, %arg1: i32) -> (i32, i32) {
    %c1_i32 = arith.constant 1 : i32
    %0 = arith.muli %arg0, %c1_i32 : i32
    %1 = arith.addi %0, %arg1 : i32
    %c0_i32 = arith.constant 0 : i32
    %2 = arith.minsi %1, %c0_i32 : i32
    %c0_i32_0 = arith.constant 0 : i32
    %c0_i32_1 = arith.constant 0 : i32
    return %2, %c0_i32_0 : i32, i32
  }
  func.func @transform_2(%arg0: i32, %arg1: i32) -> (i32, i32) {
    %c0_i32 = arith.constant 0 : i32
    %c0_i32_0 = arith.constant 0 : i32
    return %arg0, %c0_i32 : i32, i32
  }
}

</mosaic_0001>

<llo_original>
// kernel: tpu_custom_call.1
$region0: #{tpu_custom_call.1}
  #allocation0 [shape = 'u32[]', space=smem, size = 0x4, offset = 0x4, fixed_abs, tag = 'smem constant byte address 0x4 - core index']
  #allocation1 [shape = 'u32[144,128]{1,0:T(1,128)}', space=vmem, size = 0x12000, scoped, tag = 'internal scratch']
  %s0 = inlined_call_operand.vmem [shape: f32[16,32], index: 0, kind: input, shape index: {}]
  %s1 = inlined_call_operand.vmem [shape: s32[16,1], index: 1, kind: input, shape index: {}]
  %s2 = inlined_call_operand.hbm [shape: f32[1,1], index: 2, kind: output, shape index: {}]
  %s3 = sld [smem:[#allocation0]]
  $region22: #{tpu_custom_call.1} parent=0
    _
  %s5 = ssub.s32 1, %s3
  %s6 = scalar_select 0, %s5, %s3
  $region1: #{tpu_custom_call.1} parent=0
    #allocation2 [shape = 'u8[512]{0}', space=smem, size = 0x200, scoped, tag = 'output window, operand 0, single buffered']
    #allocation3 [shape = 's32[1]{0}', space=sflag, size = 0x4, scoped, tag = 'scoped memory for tpu_custom_call.1']
    %7 = vsyncpa [#allocation3], 0
    // Predicated region
    $region2: #{tpu_custom_call.1} parent=1 // pred_check
      _
    $region3: #{tpu_custom_call.1} parent=1 // pred_check_branch
      %9 = sbr.rel (0) target = $region5
    $region4: #{tpu_custom_call.1} parent=1 // pred_region
      %s10 = sadd.s32 0, 0
      %p11 = scmp.lt.s32.totalorder %s10, 0
      %s12 = scalar_select %p11, %s10, 0
      %s13 = smul.u32 2, %s12
      %p14 = scmp.lt.s32.totalorder %s13, 1
      %s15 = scalar_select %p14, %s13, 1
      %s16 = smul.addr %s15, 8
      %s17 = scalar_lea.vmem %s0, %s16
      %s18 = sadd.s32 0, 0
      %p19 = scmp.lt.s32.totalorder %s18, 0
      %s20 = scalar_select %p19, %s18, 0
      %s21 = smul.u32 2, %s20
    $region5: #{tpu_custom_call.1} parent=1 // pred_fallthru
      _
    // Predicated region
    $region6: #{tpu_custom_call.1} parent=1 // pred_check
      _
    $region7: #{tpu_custom_call.1} parent=1 // pred_check_branch
      %23 = sbr.rel (0) target = $region9
    $region8: #{tpu_custom_call.1} parent=1 // pred_region
      %s24 = sadd.s32 0, 0
      %p25 = scmp.lt.s32.totalorder %s24, 0
      %s26 = scalar_select %p25, %s24, 0
      %s27 = smul.u32 2, %s26
      %p28 = scmp.lt.s32.totalorder %s27, 1
      %s29 = scalar_select %p28, %s27, 1
      %s30 = smul.addr %s29, 8
      %s31 = scalar_lea.vmem %s1, %s30
      %s32 = sadd.s32 0, 0
      %p33 = scmp.lt.s32.totalorder %s32, 0
      %s34 = scalar_select %p33, %s32, 0
      %s35 = smul.u32 2, %s34
    $region9: #{tpu_custom_call.1} parent=1 // pred_fallthru
      _
    %s36 = sadd.s32 0, 0
    %p37 = scmp.lt.s32.totalorder %s36, 0
    %s38 = scalar_select %p37, %s36, 0
    %s39 = smul.u32 2, %s38
    %p40 = scmp.lt.s32.totalorder %s39, 1
    %s41 = scalar_select %p40, %s39, 1
    %s42 = smul.addr %s41, 8
    %s43 = scalar_lea.vmem %s0, %s42
    %s44 = sadd.s32 0, 0
    %p45 = scmp.lt.s32.totalorder %s44, 0
    %s46 = scalar_select %p45, %s44, 0
    %s47 = smul.u32 2, %s46
    %p48 = scmp.lt.s32.totalorder %s47, 1
    %s49 = scalar_select %p48, %s47, 1
    %s50 = smul.addr %s49, 8
    %s51 = scalar_lea.vmem %s1, %s50
    %s52 = sadd.s32 0, 0
    %p53 = scmp.lt.s32.totalorder %s52, 0
    %s54 = scalar_select %p53, %s52, 0
    %s55 = smul.u32 2, %s54
    %p56 = scmp.lt.s32.totalorder %s55, 1
    %s57 = scalar_select %p56, %s55, 1
    %s58 = smul.addr %s57, 8
    %s59 = scalar_lea.vmem %s0, %s58
    %s60 = sadd.s32 0, 0
    %p61 = scmp.lt.s32.totalorder %s60, 0
    %s62 = scalar_select %p61, %s60, 0
    %s63 = smul.u32 2, %s62
    %s64 = sadd.s32 0, 0
    %p65 = scmp.lt.s32.totalorder %s64, 0
    %s66 = scalar_select %p65, %s64, 0
    %s67 = smul.u32 2, %s66
    %p68 = scmp.lt.s32.totalorder %s67, 1
    %s69 = scalar_select %p68, %s67, 1
    %s70 = smul.addr %s69, 8
    %s71 = scalar_lea.vmem %s1, %s70
    %s72 = sadd.s32 0, 0
    %p73 = scmp.lt.s32.totalorder %s72, 0
    %s74 = scalar_select %p73, %s72, 0
    %s75 = smul.u32 2, %s74
    %p76 = scmp.eq.s32.totalorder 0, 0
    // Predicated region
    $region10: #{tpu_custom_call.1} parent=1 // pred_check
      %p77 = pneg %p76
    $region11: #{tpu_custom_call.1} parent=1 // pred_check_branch
      %79 = sbr.rel (%p77) target = $region13
    $region12: #{tpu_custom_call.1} parent=1 // pred_region
      %s80 = scalar_lea.smem [#allocation2], 0
      %81 = sst [smem:[%s80]] 0.0
    $region13: #{tpu_custom_call.1} parent=1 // pred_fallthru
      _
    %v82 = vld [vmem:[%s59] sm:$0xff]
    %v83 = vld [vmem:[%s59 + $0x8] sm:$0xff]
    %v84 = vld [vmem:[%s71] sm:$0xff]
    %v85 = vld [vmem:[%s71 + $0x8] sm:$0xff]
    %s86 = sadd.s32 0, 0
    %s87 = smul.u32 %s86, 16
    %v88 = vlaneseq
    %v89 = vshrl.u32 %v88, 7
    %v90 = vadd.s32 %v89, 8
    %v91 = vstv %s87
    %v92 = vadd.s32 %v91, %v89
    %v93 = vadd.s32 %v91, %v90
    %vm94 = vcmp.lt.s32.totalorder %v92, 16
    %vm95 = vcmp.lt.s32.totalorder %v93, 16
    %vm96 = vcmp.ne.s32.totalorder %v84, 4294967196
    %vm97 = vcmp.ne.s32.totalorder %v85, 4294967196
    %vm98 = vmand %vm94, %vm96
    %vm99 = vmand %vm95, %vm97
    %vm100 = vcmask 261120
    %v101 = vsel %vm100, %v82, -inf
    %102 = vmax.xlane.f32.xlu0 %v101
    %v103 = vpop.xlane.xlu0 %102
    %v104 = vsel %vm100, %v83, -inf
    %105 = vmax.xlane.f32.xlu0 %v104
    %v106 = vpop.xlane.xlu0 %105
    %v107 = vsub.f32 %v82, %v103
    %v108 = vsub.f32 %v83, %v106
    %v109 = vmul.f32 %v107, 1.442695
    %v110 = vpow.pop %v109
    %v111 = vmul.f32 %v108, 1.442695
    %v112 = vpow.pop %v111
    %v113 = vsel %vm100, %v110, 0.0
    %114 = vadd.xlane.f32.xlu0 %v113
    %v115 = vpop.xlane.xlu0 %114
    %v116 = vsel %vm100, %v112, 0.0
    %117 = vadd.xlane.f32.xlu0 %v116
    %v118 = vpop.xlane.xlu0 %117
    %v119 = vlog2.pop %v115
    %v120 = vmul.f32 %v119, 0.6931472
    %v121 = vlog2.pop %v118
    %v122 = vmul.f32 %v121, 0.6931472
    %v123 = vlaneseq
    %v124 = vand.u32 %v123, 127
    %125 = vset.pattern.permute.xlu0 0
    %126 = vperm.xlu0 %125, %v84
    %v127 = vpop.permute.xlu0 %126
    %128 = vset.pattern.permute.xlu0 0
    %129 = vperm.xlu0 %128, %v85
    %v130 = vpop.permute.xlu0 %129
    %vm131 = vcmp.eq.s32.totalorder %v124, %v127
    %vm132 = vcmp.eq.s32.totalorder %v124, %v130
    %v133 = vsel %vm131, %v107, 0.0
    %v134 = vsel %vm132, %v108, 0.0
    %v135 = vsel %vm100, %v133, 0.0
    %136 = vadd.xlane.f32.xlu0 %v135
    %v137 = vpop.xlane.xlu0 %136
    %v138 = vsel %vm100, %v134, 0.0
    %139 = vadd.xlane.f32.xlu0 %v138
    %v140 = vpop.xlane.xlu0 %139
    %v141 = vsub.f32 %v120, %v137
    %v142 = vsub.f32 %v122, %v140
    %v143 = vsub.f32 0.0, %v141
    %v144 = vsub.f32 0.0, %v142
    %v145 = vmul.f32 %v143, 1.442695
    %v146 = vpow.pop %v145
    %v147 = vmul.f32 %v144, 1.442695
    %v148 = vpow.pop %v147
    %v149 = vsub.f32 1.0, %v146
    %v150 = vsub.f32 1.0, %v148
    %v151 = vmul.f32 %v149, %v149
    %v152 = vmul.f32 %v150, %v150
    %v153 = vmul.f32 %v151, %v141
    %v154 = vmul.f32 %v152, %v142
    %v155 = vsel %vm98, %v153, 0.0
    %v156 = vsel %vm99, %v154, 0.0
    %s157 = sld [smem:[#allocation2]]
    %vm158 = vcmask 7168
    %v159 = vsel %vm158, %v155, 0.0
    %v160 = vsel %vm158, %v156, 0.0
    %v161 = vadd.f32 %v159, %v160
    %162 = vadd.xlane.f32.xlu0 %v161
    %v163 = vpop.xlane.xlu0 %162
    %v164 = vrot.slane %v163, 4
    %v165 = vadd.f32 %v163, %v164
    %v166 = vrot.slane %v165, 2
    %v167 = vadd.f32 %v165, %v166
    %v168 = vrot.slane %v167, 1
    %v169 = vadd.f32 %v167, %v168
    %s170 = vtos %v169
    %s171 = sadd.f32 %s157, %s170
    %s172 = scalar_lea.smem [#allocation2], 0
    %173 = sst [smem:[%s172]] %s171
    // Predicated region
    $region14: #{tpu_custom_call.1} parent=1 // pred_check
      _
    $region15: #{tpu_custom_call.1} parent=1 // pred_check_branch
      %175 = sbr.rel (0) target = $region17
    $region16: #{tpu_custom_call.1} parent=1 // pred_region
      %s177 = ssub.s32 16, 16
      %178 = vsyncadd [#allocation3], %s177
      %181 = dma.smem_to_hbm [#allocation2], 16, %s2, [#allocation3]
    $region17: #{tpu_custom_call.1} parent=1 // pred_fallthru
      _
    // Predicated region
    $region18: #{tpu_custom_call.1} parent=1 // pred_check
      _
    $region19: #{tpu_custom_call.1} parent=1 // pred_check_branch
      %183 = sbr.rel (0) target = $region21
    $region20: #{tpu_custom_call.1} parent=1 // pred_region
      %184 = dma.done [#allocation3], 16
    $region21: #{tpu_custom_call.1} parent=1 // pred_fallthru
      _
    %185 = sfence
    %186 = vsyncpa [#allocation3], 1

</llo_original>
